<compile_context>
chip_gen: v7x
topology: tpu7x:2x2x1
jax: 0.10.0
libtpu: 0.0.40
codegen_flags: <defaults>
</compile_context>

<pallas_src>
import functools
import math

import jax
import jax.numpy as jnp
from jax import lax
from jax.experimental import pallas as pl
from jax.experimental.pallas import tpu as pltpu


# ---------------------------------------------------------------------------
# Helpers
# ---------------------------------------------------------------------------
def _round_up(x, m):
    return ((x + m - 1) // m) * m


def _compiler_params(dim_sems, footprint_bytes):
    limit = int(min(max(32 * 1024 * 1024, 2 * footprint_bytes + (8 << 20)),
                    48 * 1024 * 1024))
    return pltpu.CompilerParams(dimension_semantics=dim_sems, vmem_limit_bytes=limit)


def _tile_dim(dim, candidates, cap):
    """Return (tile, padded_dim) for one matmul dimension."""
    for c in candidates:
        if dim >= c and dim % c == 0:
            return c, dim
    if dim <= cap:
        return dim, dim                       # full-extent block (exempt from (8,128) rule)
    base = candidates[-1]
    return base, _round_up(dim, base)         # pre-pad large, non-divisible dims


# ---------------------------------------------------------------------------
# Linear: y = x @ W^T + b (weights stored pre-transposed as (D_in, D_out)),
# bf16 MXU operands, f32 accumulator, K-reduction grid axis.
# ---------------------------------------------------------------------------
def _linear_kernel(x_ref, w_ref, b_ref, o_ref, acc_ref):
    k = pl.program_id(2)

    @pl.when(k == 0)
    def _():
        acc_ref[...] = jnp.zeros_like(acc_ref)

    acc_ref[...] += jnp.dot(x_ref[...], w_ref[...], preferred_element_type=jnp.float32)

    @pl.when(k == pl.num_programs(2) - 1)
    def _():
        o_ref[...] = (acc_ref[...] + b_ref[...]).astype(o_ref.dtype)


def linear(x2d, w_t, b, out_dtype=jnp.float32):
    """x2d: (M, D_in), w_t: (D_in, D_out), b: (D_out,) -> (M, D_out)."""
    M, K = x2d.shape
    N = w_t.shape[1]
    TM, Mp = _tile_dim(M, (512, 256, 128), cap=512)
    TN, Np = _tile_dim(N, (1024, 512, 256, 128), cap=1024)
    TK, Kp = _tile_dim(K, (1024, 512, 256, 128), cap=1024)

    xb = x2d.astype(jnp.bfloat16)
    wb = w_t.astype(jnp.bfloat16)
    b2 = b.astype(jnp.float32).reshape(1, N)
    if (Mp, Kp) != (M, K):
        xb = jnp.pad(xb, ((0, Mp - M), (0, Kp - K)))
    if (Kp, Np) != (K, N):
        wb = jnp.pad(wb, ((0, Kp - K), (0, Np - N)))
    if Np != N:
        b2 = jnp.pad(b2, ((0, 0), (0, Np - N)))

    out_isz = jnp.dtype(out_dtype).itemsize
    n_i, n_j, n_k = Mp // TM, Np // TN, Kp // TK
    cost = pl.CostEstimate(
        flops=int(2 * Mp * Kp * Np),
        transcendentals=0,
        bytes_accessed=int(2 * Mp * Kp * n_j + 2 * Kp * Np * n_i + 4 * Np + Mp * Np * out_isz),
    )
    footprint = (2 * (TM * TK * 2 + TK * TN * 2 + TN * 4 + TM * TN * out_isz)
                 + TM * TN * 4)

    out = pl.pallas_call(
        _linear_kernel,
        out_shape=jax.ShapeDtypeStruct((Mp, Np), out_dtype),
        grid=(n_i, n_j, n_k),
        in_specs=[
            pl.BlockSpec((TM, TK), lambda i, j, k: (i, k)),
            pl.BlockSpec((TK, TN), lambda i, j, k: (k, j)),
            pl.BlockSpec((1, TN), lambda i, j, k: (0, j)),
        ],
        out_specs=pl.BlockSpec((TM, TN), lambda i, j, k: (i, j)),
        scratch_shapes=[pltpu.VMEM((TM, TN), jnp.float32)],
        compiler_params=_compiler_params(("parallel", "parallel", "arbitrary"), footprint),
        cost_estimate=cost,
    )(xb, wb, b2)

    if (Mp, Np) != (M, N):
        out = out[:M, :N]
    return out


# ---------------------------------------------------------------------------
# Flash attention over packed projection outputs (no head transposes anywhere)
# ---------------------------------------------------------------------------
def _heads_per_block(h, d_k):
    """Heads grouped per grid step so the output tile is lane-dense while the q/k/v
    block shapes satisfy the TPU (8,128)/full-dim tiling rule."""
    valid = [c for c in range(1, h + 1)
             if h % c == 0 and (c == h or (c % 8 == 0 and (c * d_k) % 128 == 0))]
    for c in valid:
        if c * d_k >= 128:
            return c
    return valid[-1]


def _seq_tile(s, prefer_large):
    cands = (256, 128) if prefer_large else (128,)
    for t in cands:
        if s % t == 0:
            return t
    # TODO(synk): pad + in-kernel masking for very long sequences that are not a
    # multiple of 128; small/odd lengths run as a single full-extent block.
    return s


def _attn_body(q_ref, k_ref, v_ref, mask_ref, o_ref, m_ref, l_ref, acc_ref,
               *, scale, hb, d_k):
    j = pl.program_id(2)

    @pl.when(j == 0)
    def _():
        m_ref[...] = jnp.full_like(m_ref, -jnp.inf)
        l_ref[...] = jnp.zeros_like(l_ref)
        acc_ref[...] = jnp.zeros_like(acc_ref)

    masked_out = None
    if mask_ref is not None:
        # int8 in HBM/VMEM (4x fewer mask bytes); widen on the VPU before comparing.
        masked_out = mask_ref[...].astype(jnp.float32) == 0.0            # (TSq, TSk)

    for hh in range(hb):                                                 # static unroll
        q_h = q_ref[:, hh, :]                                            # (TSq, d_k) bf16
        k_h = k_ref[:, hh, :]                                            # (TSk, d_k) bf16
        v_h = v_ref[:, hh, :]                                            # (TSk, d_k) bf16
        # QK^T without an explicit transpose of K: contract d_k on both operands.
        s = lax.dot_general(q_h, k_h, (((1,), (1,)), ((), ())),
                            preferred_element_type=jnp.float32) * scale  # (TSq, TSk) f32
        if masked_out is not None:
            s = jnp.where(masked_out, -1e9, s)          # matches masked_fill(mask==0, -1e9)

        csl = slice(hh, hh + 1)                         # this head's column in m/l scratch
        osl = slice(hh * d_k, (hh + 1) * d_k)           # this head's lanes in acc / out
        m_prev = m_ref[:, csl]                          # (TSq, 1)
        m_new = jnp.maximum(m_prev, jnp.max(s, axis=-1, keepdims=True))
        alpha = jnp.exp(m_prev - m_new)
        p = jnp.exp(s - m_new)                          # (TSq, TSk) f32
        l_ref[:, csl] = alpha * l_ref[:, csl] + jnp.sum(p, axis=-1, keepdims=True)
        pv = jnp.dot(p.astype(v_h.dtype), v_h, preferred_element_type=jnp.float32)
        acc_ref[:, osl] = alpha * acc_ref[:, osl] + pv
        m_ref[:, csl] = m_new

    @pl.when(j == pl.num_programs(2) - 1)
    def _():
        for hh in range(hb):
            csl = slice(hh, hh + 1)
            osl = slice(hh * d_k, (hh + 1) * d_k)
            # Normalize the (TSq, d_k) output instead of the (TSq, TSk) probabilities;
            # approximate reciprocal runs on the EUP slot.
            inv_l = pl.reciprocal(l_ref[:, csl], approx=True)
            o_ref[:, osl] = (acc_ref[:, osl] * inv_l).astype(o_ref.dtype)


def _attn_kernel(q_ref, k_ref, v_ref, o_ref, m_ref, l_ref, acc_ref, *, scale, hb, d_k):
    _attn_body(q_ref, k_ref, v_ref, None, o_ref, m_ref, l_ref, acc_ref,
               scale=scale, hb=hb, d_k=d_k)


def _attn_kernel_masked(mask_ref, q_ref, k_ref, v_ref, o_ref, m_ref, l_ref, acc_ref,
                        *, scale, hb, d_k):
    _attn_body(q_ref, k_ref, v_ref, mask_ref, o_ref, m_ref, l_ref, acc_ref,
               scale=scale, hb=hb, d_k=d_k)


def flash_attention(q_src, k_src, v_src, offsets, mask=None, out_dtype=jnp.bfloat16):
    """Scaled dot-product attention over packed projection outputs.

    q_src: (B, Sq, Nq, h, d_k); k_src/v_src: (B, Sk, Nk, h, d_k) (possibly the same array
    as q_src).  `offsets` selects the q/k/v stream on axis 2 of each source.  The output
    is written directly in the (B, Sq, h*d_k) "concat heads" layout.
    """
    oq, ok, ov = offsets
    B, Sq, _, H, d_k = q_src.shape
    Sk = k_src.shape[1]
    D = H * d_k
    scale = 1.0 / math.sqrt(d_k)

    hb = _heads_per_block(H, d_k)
    n_hg = H // hb
    TSq = _seq_tile(Sq, prefer_large=True)
    TSk = _seq_tile(Sk, prefer_large=False)
    n_sq, n_sk = Sq // TSq, Sk // TSk

    q_spec = pl.BlockSpec((None, TSq, None, hb, d_k),
                          lambda bh, i, j: (bh // n_hg, i, oq, bh % n_hg, 0))
    k_spec = pl.BlockSpec((None, TSk, None, hb, d_k),
                          lambda bh, i, j: (bh // n_hg, j, ok, bh % n_hg, 0))
    v_spec = pl.BlockSpec((None, TSk, None, hb, d_k),
                          lambda bh, i, j: (bh // n_hg, j, ov, bh % n_hg, 0))
    o_spec = pl.BlockSpec((None, TSq, hb * d_k),
                          lambda bh, i, j: (bh // n_hg, i, bh % n_hg))

    out_isz = jnp.dtype(out_dtype).itemsize
    bytes_accessed = (B * H * Sq * d_k * 2                       # q (resident across kv tiles)
                      + 2 * B * n_hg * n_sq * Sk * hb * d_k * 2  # k, v re-streamed per q tile
                      + B * H * Sq * d_k * out_isz)              # output
    if mask is not None:
        bytes_accessed += B * n_hg * Sq * Sk                     # int8 mask, per head group
    cost = pl.CostEstimate(flops=int(4 * B * H * Sq * Sk * d_k),
                           transcendentals=int(B * H * Sq * Sk),
                           bytes_accessed=int(bytes_accessed))

    footprint = (2 * (TSq * hb * d_k * 2 + 2 * TSk * hb * d_k * 2 + TSq * hb * d_k * out_isz)
                 + 2 * TSq * hb * 4 + TSq * hb * d_k * 4 + 4 * TSq * TSk * 4)
    if mask is not None:
        footprint += 2 * TSq * TSk

    if mask is None:
        kernel = functools.partial(_attn_kernel, scale=scale, hb=hb, d_k=d_k)
        in_specs = [q_spec, k_spec, v_spec]
        args = (q_src, k_src, v_src)
    else:
        # TODO(synk): causal masks could be generated in-kernel from iota (zero mask DMA).
        kernel = functools.partial(_attn_kernel_masked, scale=scale, hb=hb, d_k=d_k)
        mask_spec = pl.BlockSpec((None, TSq, TSk), lambda bh, i, j: (bh // n_hg, i, j))
        in_specs = [mask_spec, q_spec, k_spec, v_spec]
        args = ((mask != 0).astype(jnp.int8), q_src, k_src, v_src)

    return pl.pallas_call(
        kernel,
        out_shape=jax.ShapeDtypeStruct((B, Sq, D), out_dtype),
        grid=(B * n_hg, n_sq, n_sk),
        in_specs=in_specs,
        out_specs=o_spec,
        scratch_shapes=[pltpu.VMEM((TSq, hb), jnp.float32),        # running max, per head
                        pltpu.VMEM((TSq, hb), jnp.float32),        # running sum, per head
                        pltpu.VMEM((TSq, hb * d_k), jnp.float32)], # output accumulator
        compiler_params=_compiler_params(("parallel", "parallel", "arbitrary"), footprint),
        cost_estimate=cost,
    )(*args)


# ---------------------------------------------------------------------------
# Full MultiHeadedAttention forward (eval mode)
# ---------------------------------------------------------------------------
def multi_headed_attention_forward(query, key, value, params, h, mask=None):
    """query/key/value: (B, S, D) with D % h == 0; mask: optional (B, Sq, Sk), nonzero = keep.

    params: ((wq_t, bq), (wk_t, bk), (wv_t, bv), (wo_t, bo)); weights stored as (D, D)
    transposes of torch's (out, in) layout.
    """
    # TODO(synk): dropout(p=0.1) on the attention probabilities is identity at inference;
    # training-mode dropout is not implemented in the kernel.
    (wq, bq), (wk, bk), (wv, bv), (wo, bo) = params
    B, Sq, D = query.shape
    d_k = D // h

    if (query is key) and (key is value):
        # Self-attention: fused QKV projection - x is read from HBM once, one (D, 3D) matmul.
        w_qkv = jnp.concatenate([wq, wk, wv], axis=1)
        b_qkv = jnp.concatenate([bq, bk, bv], axis=0)
        qkv = linear(query.reshape(B * Sq, D), w_qkv, b_qkv, out_dtype=jnp.bfloat16)
        qkv = qkv.reshape(B, Sq, 3, h, d_k)                       # pure view, no relayout
        q_src = k_src = v_src = qkv
        offsets = (0, 1, 2)
    else:
        Bk, Sk, _ = key.shape
        q_src = linear(query.reshape(B * Sq, D), wq, bq,
                       out_dtype=jnp.bfloat16).reshape(B, Sq, 1, h, d_k)
        if key is value:
            # Cross-attention over a shared memory: fused K/V projection.
            w_kv = jnp.concatenate([wk, wv], axis=1)
            b_kv = jnp.concatenate([bk, bv], axis=0)
            kv = linear(key.reshape(Bk * Sk, D), w_kv, b_kv,
                        out_dtype=jnp.bfloat16).reshape(Bk, Sk, 2, h, d_k)
            k_src = v_src = kv
            offsets = (0, 0, 1)
        else:
            k_src = linear(key.reshape(Bk * Sk, D), wk, bk,
                           out_dtype=jnp.bfloat16).reshape(Bk, Sk, 1, h, d_k)
            v_src = linear(value.reshape(Bk * Sk, D), wv, bv,
                           out_dtype=jnp.bfloat16).reshape(Bk, Sk, 1, h, d_k)
            offsets = (0, 0, 0)

    x = flash_attention(q_src, k_src, v_src, offsets, mask=mask)  # (B, Sq, D) bf16
    out = linear(x.reshape(B * Sq, D), wo, bo, out_dtype=jnp.float32)
    return out.reshape(B, Sq, D)


# ---------------------------------------------------------------------------
# Parameter init (mimics torch nn.Linear default U(-1/sqrt(in), 1/sqrt(in)))
# ---------------------------------------------------------------------------
def init_mha_params(key, d_model):
    bound = 1.0 / math.sqrt(d_model)
    keys = jax.random.split(key, 8)
    params = []
    for i in range(4):
        w_t = jax.random.uniform(keys[2 * i], (d_model, d_model), jnp.float32, -bound, bound)
        b = jax.random.uniform(keys[2 * i + 1], (d_model,), jnp.float32, -bound, bound)
        params.append((w_t, b))
    return tuple(params)


# ---------------------------------------------------------------------------
# Plain-JAX f32 reference (same semantics as the PyTorch module, eval mode)
# ---------------------------------------------------------------------------
def mha_reference(query, key, value, params, h, mask=None):
    (wq, bq), (wk, bk), (wv, bv), (wo, bo) = params
    B, S, D = query.shape
    d_k = D // h

    def proj(x, w, b):
        Bx, Sx, _ = x.shape
        return (x @ w + b).reshape(Bx, Sx, h, d_k).transpose(0, 2, 1, 3)

    q, k, v = proj(query, wq, bq), proj(key, wk, bk), proj(value, wv, bv)
    scores = jnp.einsum('bhqd,bhkd->bhqk', q, k) / math.sqrt(d_k)
    if mask is not None:
        scores = jnp.where(mask[:, None, :, :] == 0, -1e9, scores)
    p = jax.nn.softmax(scores, axis=-1)
    x = jnp.einsum('bhqk,bhkd->bhqd', p, v)
    x = x.transpose(0, 2, 1, 3).reshape(B, S, D)
    return x @ wo + bo


if __name__ == "__main__":
    key0 = jax.random.PRNGKey(0)
    kx, km, kp = jax.random.split(key0, 3)

    B, S, D, H = 2, 8, 32, 4   # batch, seq, hidden (in_features), heads
    x = jax.random.normal(kx, (B, S, D), jnp.float32)
    mem = jax.random.normal(km, (B, S, D), jnp.float32)
    params = init_mha_params(kp, D)

    TOL = dict(atol=3e-2, rtol=3e-2)  # bf16 MXU operands vs f32 reference

    # 1) self-attention, no mask (fused QKV path)
    out = jax.block_until_ready(multi_headed_attention_forward(x, x, x, params, H))
    ref = mha_reference(x, x, x, params, H)
    assert out.shape == (B, S, D)
    assert jnp.allclose(out, ref, **TOL), float(jnp.max(jnp.abs(out - ref)))

    # 2) self-attention with a causal mask (broadcast over heads like mask.unsqueeze(1))
    causal = jnp.broadcast_to(jnp.tril(jnp.ones((S, S), jnp.float32)), (B, S, S))
    out_m = jax.block_until_ready(
        multi_headed_attention_forward(x, x, x, params, H, mask=causal))
    ref_m = mha_reference(x, x, x, params, H, mask=causal)
    assert jnp.allclose(out_m, ref_m, **TOL), float(jnp.max(jnp.abs(out_m - ref_m)))

    # 3) cross-attention over a shared memory (fused K/V path)
    out_c = jax.block_until_ready(multi_headed_attention_forward(x, mem, mem, params, H))
    ref_c = mha_reference(x, mem, mem, params, H)
    assert jnp.allclose(out_c, ref_c, **TOL), float(jnp.max(jnp.abs(out_c - ref_c)))

    print("KERNEL_OK")
</pallas_src>

<mosaic_0001>
module attributes {stable_mosaic.version = 11 : i64} {
  func.func @_linear_kernel(%arg0: i32, %arg1: i32, %arg2: i32, %arg3: memref<16x32xbf16, #tpu.memory_space<vmem>>, %arg4: memref<32x96xbf16, #tpu.memory_space<vmem>>, %arg5: memref<1x96xf32, #tpu.memory_space<vmem>>, %arg6: memref<16x96xbf16, #tpu.memory_space<vmem>>, %arg7: memref<16x96xf32, #tpu.memory_space<vmem>>) attributes {dimension_semantics = [#tpu.dimension_semantics<parallel>, #tpu.dimension_semantics<parallel>, #tpu.dimension_semantics<arbitrary>], iteration_bounds = array<i64: 1, 1, 1>, scalar_prefetch = 0 : i64, scratch_operands = 1 : i64, tpu.core_type = #tpu.core_type<tc>, window_params = [{transform_indices = @transform_0, window_bounds = array<i64: 16, 32>}, {transform_indices = @transform_1, window_bounds = array<i64: 32, 96>}, {transform_indices = @transform_2, window_bounds = array<i64: 1, 96>}, {transform_indices = @transform_3, window_bounds = array<i64: 16, 96>}]} {
    %c0_i32 = arith.constant 0 : i32
    %0 = arith.cmpi eq, %arg2, %c0_i32 : i32
    %1 = arith.extui %0 : i1 to i32
    %c0_i32_0 = arith.constant 0 : i32
    %2 = arith.cmpi ne, %1, %c0_i32_0 : i32
    scf.if %2 {
      %cst_10 = arith.constant 0.000000e+00 : f32
      %12 = vector.broadcast %cst_10 : f32 to vector<16x96xf32>
      %c0_11 = arith.constant 0 : index
      %c0_12 = arith.constant 0 : index
      %13 = vector.load %arg7[%c0_11, %c0_12] : memref<16x96xf32, #tpu.memory_space<vmem>>, vector<16x96xf32>
      tpu.vector_store %arg7[%c0_11, %c0_12], %12 {strides = array<i32>} : memref<16x96xf32, #tpu.memory_space<vmem>>, vector<16x96xf32>,
    } else {
    }
    %c0 = arith.constant 0 : index
    %c0_1 = arith.constant 0 : index
    %3 = vector.load %arg7[%c0, %c0_1] : memref<16x96xf32, #tpu.memory_space<vmem>>, vector<16x96xf32>
    %c0_2 = arith.constant 0 : index
    %c0_3 = arith.constant 0 : index
    %4 = vector.load %arg3[%c0_2, %c0_3] : memref<16x32xbf16, #tpu.memory_space<vmem>>, vector<16x32xbf16>
    %c0_4 = arith.constant 0 : index
    %c0_5 = arith.constant 0 : index
    %5 = vector.load %arg4[%c0_4, %c0_5] : memref<32x96xbf16, #tpu.memory_space<vmem>>, vector<32x96xbf16>
    %cst = arith.constant dense<0.000000e+00> : vector<16x96xf32>
    %6 = tpu.matmul %4, %5, %cst {dimension_numbers = #tpu.dot_dimension_numbers<[1], [0], [0], [1], [0, 0, 1, 1], [], []>} : vector<16x32xbf16>, vector<32x96xbf16>, vector<16x96xf32> -> vector<16x96xf32>
    %7 = arith.addf %3, %6 : vector<16x96xf32>
    %c0_6 = arith.constant 0 : index
    %c0_7 = arith.constant 0 : index
    %8 = vector.load %arg7[%c0_6, %c0_7] : memref<16x96xf32, #tpu.memory_space<vmem>>, vector<16x96xf32>
    tpu.vector_store %arg7[%c0_6, %c0_7], %7 {strides = array<i32>} : memref<16x96xf32, #tpu.memory_space<vmem>>, vector<16x96xf32>,
    %c0_i32_8 = arith.constant 0 : i32
    %9 = arith.cmpi eq, %arg2, %c0_i32_8 : i32
    %10 = arith.extui %9 : i1 to i32
    %c0_i32_9 = arith.constant 0 : i32
    %11 = arith.cmpi ne, %10, %c0_i32_9 : i32
    scf.if %11 {
      %c0_10 = arith.constant 0 : index
      %c0_11 = arith.constant 0 : index
      %12 = vector.load %arg7[%c0_10, %c0_11] : memref<16x96xf32, #tpu.memory_space<vmem>>, vector<16x96xf32>
      %c0_12 = arith.constant 0 : index
      %c0_13 = arith.constant 0 : index
      %13 = vector.load %arg5[%c0_12, %c0_13] : memref<1x96xf32, #tpu.memory_space<vmem>>, vector<1x96xf32>
      %14 = vector.broadcast %13 : vector<1x96xf32> to vector<16x96xf32>
      %15 = arith.addf %12, %14 : vector<16x96xf32>
      %16 = arith.truncf %15 : vector<16x96xf32> to vector<16x96xbf16>
      %c0_14 = arith.constant 0 : index
      %c0_15 = arith.constant 0 : index
      %17 = vector.load %arg6[%c0_14, %c0_15] : memref<16x96xbf16, #tpu.memory_space<vmem>>, vector<16x96xbf16>
      tpu.vector_store %arg6[%c0_14, %c0_15], %16 {strides = array<i32>} : memref<16x96xbf16, #tpu.memory_space<vmem>>, vector<16x96xbf16>,
    } else {
    }
    return
  }
  func.func @transform_0(%arg0: i32, %arg1: i32, %arg2: i32) -> (i32, i32) {
    %c0_i32 = arith.constant 0 : i32
    return %arg0, %arg2 : i32, i32
  }
  func.func @transform_1(%arg0: i32, %arg1: i32, %arg2: i32) -> (i32, i32) {
    %c0_i32 = arith.constant 0 : i32
    return %arg2, %arg1 : i32, i32
  }
  func.func @transform_2(%arg0: i32, %arg1: i32, %arg2: i32) -> (i32, i32) {
    %c0_i32 = arith.constant 0 : i32
    %c0_i32_0 = arith.constant 0 : i32
    return %c0_i32, %arg1 : i32, i32
  }
  func.func @transform_3(%arg0: i32, %arg1: i32, %arg2: i32) -> (i32, i32) {
    %c0_i32 = arith.constant 0 : i32
    return %arg0, %arg1 : i32, i32
  }
}

</mosaic_0001>

<llo_original>
// kernel: tpu_custom_call.1
$region0: #{tpu_custom_call.1}
  #allocation0 [shape = 'u32[]', space=smem, size = 0x4, offset = 0x4, fixed_abs, tag = 'smem constant byte address 0x4 - core index']
  #allocation1 [shape = 'u32[144,128]{1,0:T(1,128)}', space=vmem, size = 0x12000, scoped, tag = 'internal scratch']
  #allocation2 [shape = 'f32[16,96]{1,0:T(8,128)}', space=vmem, size = 0x2000, scoped, tag = 'scratch operand']
  %s0 = inlined_call_operand.hbm [shape: bf16[16,32], index: 0, kind: input, shape index: {}]
  %s1 = inlined_call_operand.hbm [shape: bf16[32,96], index: 1, kind: input, shape index: {}]
  %s2 = inlined_call_operand.vmem [shape: f32[1,96], index: 2, kind: input, shape index: {}]
  %s3 = inlined_call_operand.hbm [shape: bf16[16,96], index: 3, kind: output, shape index: {}]
  %s4 = sld [smem:[#allocation0]]
  $region38: #{tpu_custom_call.1} parent=0
    _
  %s6 = ssub.s32 1, %s4
  %s7 = scalar_select 0, %s6, %s4
  $region1: #{tpu_custom_call.1} parent=0
    #allocation3 [shape = 'u8[4096]{0}', space=vmem, size = 0x1000, scoped, tag = 'input window, operand 0, single buffered']
    #allocation4 [shape = 's32[1]{0}', space=sflag, size = 0x4, scoped, tag = 'scoped memory for tpu_custom_call.1']
    #allocation5 [shape = 's32[1]{0}', space=sflag, size = 0x4, scoped, tag = 'scoped memory for tpu_custom_call.1']
    #allocation6 [shape = 'u8[8192]{0}', space=vmem, size = 0x2000, scoped, tag = 'input window, operand 1, single buffered']
    #allocation7 [shape = 's32[1]{0}', space=sflag, size = 0x4, scoped, tag = 'scoped memory for tpu_custom_call.1']
    #allocation8 [shape = 'u8[4096]{0}', space=vmem, size = 0x1000, scoped, tag = 'output window, operand 0, single buffered']
    %8 = vsyncpa [#allocation4], 0
    %9 = vsyncpa [#allocation7], 0
    %10 = vsyncpa [#allocation5], 0
    // Predicated region
    $region2: #{tpu_custom_call.1} parent=1 // pred_check
      _
    $region3: #{tpu_custom_call.1} parent=1 // pred_check_branch
      %12 = sbr.rel (0) target = $region5
    $region4: #{tpu_custom_call.1} parent=1 // pred_region
      %s14 = ssub.s32 128, 128
      %15 = vsyncadd [#allocation4], %s14
      %s16 = sshll.u32 [#allocation3], 4
      %s17 = int_to_ptr.vmem [resolvable:$true] %s16
      %22 = dma.hbm_to_vmem [thread:$0]  %s0, 128, %s17, [#allocation4], 64, 64, 4
    $region5: #{tpu_custom_call.1} parent=1 // pred_fallthru
      _
    // Predicated region
    $region6: #{tpu_custom_call.1} parent=1 // pred_check
      _
    $region7: #{tpu_custom_call.1} parent=1 // pred_check_branch
      %24 = sbr.rel (0) target = $region9
    $region8: #{tpu_custom_call.1} parent=1 // pred_region
      %s26 = ssub.s32 256, 256
      %27 = vsyncadd [#allocation7], %s26
      %s28 = sshll.u32 [#allocation6], 4
      %s29 = int_to_ptr.vmem [resolvable:$true] %s28
      %34 = dma.hbm_to_vmem [thread:$0]  %s1, 256, %s29, [#allocation7], 64, 64, 4
    $region9: #{tpu_custom_call.1} parent=1 // pred_fallthru
      _
    // Predicated region
    $region10: #{tpu_custom_call.1} parent=1 // pred_check
      _
    $region11: #{tpu_custom_call.1} parent=1 // pred_check_branch
      %36 = sbr.rel (0) target = $region13
    $region12: #{tpu_custom_call.1} parent=1 // pred_region
      _
    $region13: #{tpu_custom_call.1} parent=1 // pred_fallthru
      _
    // Predicated region
    $region14: #{tpu_custom_call.1} parent=1 // pred_check
      _
    $region15: #{tpu_custom_call.1} parent=1 // pred_check_branch
      %38 = sbr.rel (0) target = $region17
    $region16: #{tpu_custom_call.1} parent=1 // pred_region
      %39 = dma.done [#allocation4], 128
    $region17: #{tpu_custom_call.1} parent=1 // pred_fallthru
      _
    // Predicated region
    $region18: #{tpu_custom_call.1} parent=1 // pred_check
      _
    $region19: #{tpu_custom_call.1} parent=1 // pred_check_branch
      %41 = sbr.rel (0) target = $region21
    $region20: #{tpu_custom_call.1} parent=1 // pred_region
      %42 = dma.done [#allocation7], 256
    $region21: #{tpu_custom_call.1} parent=1 // pred_fallthru
      _
    %p44 = scmp.eq.s32.totalorder 0, 0
    // Predicated region
    $region22: #{tpu_custom_call.1} parent=1 // pred_check
      %p45 = pneg %p44
    $region23: #{tpu_custom_call.1} parent=1 // pred_check_branch
      %47 = sbr.rel (%p45) target = $region25
    $region24: #{tpu_custom_call.1} parent=1 // pred_region
      %vm48 = vcmask 785408
      %49 = vst.msk [vmem:[#allocation2] sm:$0xff] %vm48, 0.0
      %50 = vst.msk [vmem:[#allocation2 + $0x8] sm:$0xff] %vm48, 0.0
    $region25: #{tpu_custom_call.1} parent=1 // pred_fallthru
      _
    %v51 = vld [vmem:[#allocation2] sm:$0xff]
    %v52 = vld [vmem:[#allocation2 + $0x8] sm:$0xff]
    %v53 = vld [vmem:[#allocation3] sm:$0xf]
    %v54 = vld [vmem:[#allocation3 + $0x4] sm:$0xf]
    %v55 = vld [vmem:[#allocation6] sm:$0xf]
    %v56 = vld [vmem:[#allocation6 + $0x4] sm:$0xf]
    %v57 = vld [vmem:[#allocation6 + $0x8] sm:$0xf]
    %v58 = vld [vmem:[#allocation6 + $0xc] sm:$0xf]
    %v61 = vunpack.c.l.b16 %v53
    %v62 = vunpack.c.l.b16 %v54
    %v63 = vpack.c.b16 %v62, %v61
    %v68 = vunpack.c.l.b16 %v55
    %v69 = vunpack.c.l.b16 %v56
    %v70 = vunpack.c.l.b16 %v57
    %v71 = vunpack.c.l.b16 %v58
    %v72 = vpack.c.b16 %v69, %v68
    %v73 = vpack.c.b16 %v71, %v70
    %vm76 = vcmask 261120
    %v78 = vsel %vm76, %v63, 0
    %80 = vmatprep.subr.bf16.mxu0 0
    %81 = vmatpush1.bf16.msra.mxu0 %v72
    %82 = vmatprep.subr.bf16.mxu0 0
    %83 = vmatpush1.bf16.msra.mxu0 %v73
    %84 = vmatprep.subr.bf16.mxu0 0
    %85 = vmatpush1.bf16.msra.mxu0 0
    %86 = vmatprep.subr.bf16.mxu0 0
    %87 = vmatpush1.bf16.msra.mxu0 0
    %88 = vmatprep.subr.bf16.mxu0 0
    %89 = vmatpush1.bf16.msra.mxu0 0
    %90 = vmatprep.subr.bf16.mxu0 0
    %91 = vmatpush1.bf16.msra.mxu0 0
    %92 = vmatprep.subr.bf16.mxu0 0
    %93 = vmatpush1.bf16.msra.mxu0 0
    %94 = vmatprep.subr.bf16.mxu0 0
    %95 = vmatpush1.bf16.msra.mxu0 0
    %96 = vmatprep.subr.bf16.mxu0 0
    %97 = vmatpush1.bf16.msra.mxu0 0
    %98 = vmatprep.subr.bf16.mxu0 0
    %99 = vmatpush1.bf16.msra.mxu0 0
    %100 = vmatprep.subr.bf16.mxu0 0
    %101 = vmatpush1.bf16.msra.mxu0 0
    %102 = vmatprep.subr.bf16.mxu0 0
    %103 = vmatpush1.bf16.msra.mxu0 0
    %104 = vmatprep.subr.bf16.mxu0 0
    %105 = vmatpush1.bf16.msra.mxu0 0
    %106 = vmatprep.subr.bf16.mxu0 0
    %107 = vmatpush1.bf16.msra.mxu0 0
    %108 = vmatprep.subr.bf16.mxu0 0
    %109 = vmatpush1.bf16.msra.mxu0 0
    %110 = vmatprep.subr.bf16.mxu0 0
    %111 = vmatpush1.bf16.msra.mxu0 0
    %112 = vmatprep.mubr.bf16.mxu0 0
    %113 = vmatmul.mubr.bf16.gmra.mrb[0].mxu0 %v78
    %v114 = vpop.f32.mrb[0].mxu0
    %v115 = vadd.f32 0.0, %v114
    %v116 = vpop.f32.mrb[0].mxu0
    %v117 = vpop.f32.mrb[0].mxu0
    %v118 = vadd.f32 0.0, %v117
    %v119 = vpop.f32.mrb[0].mxu0
    %120 = vdwg.mxu0
    %v121 = vadd.f32 %v51, %v115
    %v122 = vadd.f32 %v52, %v118
    %vm123 = vcmask 785408
    %124 = vst.msk [vmem:[#allocation2] sm:$0xff] %vm123, %v121
    %125 = vst.msk [vmem:[#allocation2 + $0x8] sm:$0xff] %vm123, %v122
    // Predicated region
    $region26: #{tpu_custom_call.1} parent=1 // pred_check
      %p126 = pneg %p44
    $region27: #{tpu_custom_call.1} parent=1 // pred_check_branch
      %128 = sbr.rel (%p126) target = $region29
    $region28: #{tpu_custom_call.1} parent=1 // pred_region
      %v129 = vld [vmem:[#allocation2] sm:$0xff]
      %v130 = vld [vmem:[#allocation2 + $0x8] sm:$0xff]
      %v131 = vld [vmem:[%s2] sm:$0x1]
      %v133 = vlaneseq
      %v134 = vshrl.u32 %v133, 7
      %v135 = vsub.s32 0, %v134
      %v136 = vrot.slane %v131, %v135
      %v138 = vadd.f32 %v129, %v136
      %v139 = vadd.f32 %v130, %v136
      %v140 = vpack.c.bf16 %v139, %v138
      %v142 = vunpack.c.l.b16 %v140
      %v143 = vunpack.c.h.b16 %v140
      %v144 = vpack.c.b16 %v142, %v142
      %v145 = vpack.c.b16 %v143, %v143
      %vm148 = vcmask 781312
      %149 = vst.msk [vmem:[#allocation8] sm:$0xf] %vm148, %v144
      %150 = vst.msk [vmem:[#allocation8 + $0x4] sm:$0xf] %vm148, %v145
    $region29: #{tpu_custom_call.1} parent=1 // pred_fallthru
      _
    // Predicated region
    $region30: #{tpu_custom_call.1} parent=1 // pred_check
      _
    $region31: #{tpu_custom_call.1} parent=1 // pred_check_branch
      %152 = sbr.rel (0) target = $region33
    $region32: #{tpu_custom_call.1} parent=1 // pred_region
      %s154 = ssub.s32 128, 128
      %155 = vsyncadd [#allocation5], %s154
      %s156 = sshll.u32 [#allocation8], 4
      %s157 = int_to_ptr.vmem [resolvable:$true] %s156
      %162 = dma.vmem_to_hbm [thread:$0]  %s157, 128, %s3, [#allocation5], 64, 64, 4
    $region33: #{tpu_custom_call.1} parent=1 // pred_fallthru
      _
    // Predicated region
    $region34: #{tpu_custom_call.1} parent=1 // pred_check
      _
    $region35: #{tpu_custom_call.1} parent=1 // pred_check_branch
      %164 = sbr.rel (0) target = $region37
    $region36: #{tpu_custom_call.1} parent=1 // pred_region
      %165 = dma.done [#allocation5], 128
    $region37: #{tpu_custom_call.1} parent=1 // pred_fallthru
      _
    %166 = vsyncpa [#allocation4], 1
    %167 = vsyncpa [#allocation7], 1
    %168 = vsyncpa [#allocation5], 1

</llo_original>
